<compile_context>
chip_gen: v7x
topology: tpu7x:2x2x1
jax: 0.10.0
libtpu: 0.0.40
codegen_flags: <defaults>
</compile_context>

<pallas_src>
import functools

import jax
import jax.numpy as jnp
from jax.experimental import pallas as pl
from jax.experimental.pallas import tpu as pltpu


# ---------------------------------------------------------------------------
# Budget / tiling helpers.
# ---------------------------------------------------------------------------
def _round_up(x, m):
    return ((x + m - 1) // m) * m


def _vmem_budget_bytes():
    """Generation-aware scoped-VMEM budget with headroom for compiler scratch."""
    cap = 64 * 1024 * 1024  # conservative default (v7x per-core VMEM)
    try:
        info = pltpu.get_tpu_info()
        cap = int(getattr(info, "vmem_capacity_bytes", cap))
    except Exception:
        pass
    # ~75% of physical: ~48 MiB on v7x (64 MiB), ~96-100 MiB on v5e/v6e (128 MiB).
    return max(32 * 1024 * 1024, min((cap * 3) // 4, 100 * 1024 * 1024))


def _sublane(dtype):
    """Row alignment matching sublane packing: 8 f32, 16 bf16, 32 int8/fp8."""
    return max(8, 32 // jnp.dtype(dtype).itemsize)


_ROW_TILE_CANDIDATES = (2048, 1024, 512, 256, 128, 64, 32, 16, 8)


def _choose_row_tile(M, sublane, budget_rows, cap=1024):
    """Largest row tile (multiple of `sublane`, <= cap, <= budget_rows) whose
    zero-padding waste stays small.  Never degenerates to tiny tiles just
    because M is awkward -- we pad M up to a multiple of the tile instead."""
    budget_rows = max(sublane, (budget_rows // sublane) * sublane)
    cands = [t for t in _ROW_TILE_CANDIDATES if sublane <= t <= min(cap, budget_rows)]
    if not cands:
        return sublane
    for t in cands:  # largest first
        waste = _round_up(M, t) - M
        if waste <= max(M // 4, sublane):
            return t
    return cands[-1]


def _maybe_split_for_megacore(M, tm, sublane):
    """Prefer >=2 row tiles (both v7x TensorCores get work) when M allows."""
    if M >= 2 * sublane and _round_up(M, tm) <= tm:
        return max(sublane, _round_up(-(-M // 2), sublane))
    return tm


# ---------------------------------------------------------------------------
# Kernels.
# ---------------------------------------------------------------------------
def _fused_resident_kernel(*refs, eps, do_norm):
    """[optional LayerNorm](x_tile) @ W + bias with W fully VMEM-resident."""
    if do_norm:
        x_ref, g_ref, b_ref, w_ref, bias_ref, o_ref = refs
    else:
        x_ref, w_ref, bias_ref, o_ref = refs

    x = x_ref[...]
    if do_norm:
        xf = x.astype(jnp.float32)                                   # (tm, D)
        mean = jnp.mean(xf, axis=-1, keepdims=True)
        centered = xf - mean
        var = jnp.mean(centered * centered, axis=-1, keepdims=True)  # biased var
        inv = jax.lax.rsqrt(var + eps)
        y = (centered * inv) * g_ref[...].astype(jnp.float32) \
            + b_ref[...].astype(jnp.float32)
        # Keep MXU operand in the input dtype (bf16 stays bf16); f32 accumulate.
        x = y.astype(w_ref.dtype)
    # TODO(synk): on v5e, casting f32 operands to bf16 here would ~2x MXU
    # throughput but changes numerics, so it is not done by default.
    acc = jnp.dot(x, w_ref[...], preferred_element_type=jnp.float32)
    o_ref[...] = (acc + bias_ref[...].astype(jnp.float32)).astype(o_ref.dtype)


def _fused_tiled_norm_kernel(x_ref, g_ref, b_ref, w_ref, bias_ref, o_ref, xn_ref,
                             *, eps):
    """LayerNorm once per row tile (cached in VMEM scratch at j == 0), then the
    matmul against streamed weight column tiles."""
    @pl.when(pl.program_id(1) == 0)
    def _():
        x = x_ref[...].astype(jnp.float32)                           # (tm, D)
        mean = jnp.mean(x, axis=-1, keepdims=True)
        centered = x - mean
        var = jnp.mean(centered * centered, axis=-1, keepdims=True)  # biased var
        inv = jax.lax.rsqrt(var + eps)
        y = (centered * inv) * g_ref[...].astype(jnp.float32) \
            + b_ref[...].astype(jnp.float32)
        xn_ref[...] = y.astype(xn_ref.dtype)

    acc = jnp.dot(xn_ref[...], w_ref[...], preferred_element_type=jnp.float32)
    o_ref[...] = (acc + bias_ref[...].astype(jnp.float32)).astype(o_ref.dtype)


def _tiled_linear_kernel(x_ref, w_ref, bias_ref, o_ref):
    acc = jnp.dot(x_ref[...], w_ref[...], preferred_element_type=jnp.float32)
    o_ref[...] = (acc + bias_ref[...].astype(jnp.float32)).astype(o_ref.dtype)


def _layernorm_kernel(x_ref, g_ref, b_ref, o_ref, *, eps):
    x = x_ref[...].astype(jnp.float32)                               # (tm, D)
    mean = jnp.mean(x, axis=-1, keepdims=True)
    centered = x - mean
    var = jnp.mean(centered * centered, axis=-1, keepdims=True)      # biased var
    inv = jax.lax.rsqrt(var + eps)
    y = (centered * inv) * g_ref[...].astype(jnp.float32) \
        + b_ref[...].astype(jnp.float32)
    o_ref[...] = y.astype(o_ref.dtype)


# ---------------------------------------------------------------------------
# Wrapper: y = [LayerNorm(x) if gamma is given else x] @ W + bias.
# ---------------------------------------------------------------------------
def _fused_norm_matmul(x, w, bias, gamma=None, beta=None, eps=1e-5):
    *lead, D = x.shape
    D_out = w.shape[1]
    dtype = x.dtype
    itemsize = jnp.dtype(dtype).itemsize
    do_norm = gamma is not None

    x2 = x.reshape(-1, D)
    M = x2.shape[0]

    budget = _vmem_budget_bytes()
    sub = _sublane(dtype)

    # Lane-dense output / weight columns: pad D_out up to a multiple of 128.
    D_out_pad = _round_up(D_out, 128)
    if D_out_pad != D_out:
        w = jnp.pad(w, ((0, 0), (0, D_out_pad - D_out)))
        bias = jnp.pad(bias, ((0, D_out_pad - D_out),))
    bias2 = bias.reshape(1, D_out_pad)
    if do_norm:
        g2 = gamma.reshape(1, D)
        b2 = beta.reshape(1, D)

    w_bytes = D * D_out_pad * itemsize
    small_bytes = (3 * D + D_out_pad) * 4          # gamma/beta/bias (negligible)
    resident_w = 2 * w_bytes <= min(budget // 3, 16 * 1024 * 1024)

    if resident_w:
        tn = D_out_pad
        per_row = (2 * D + 2 * tn) * itemsize      # double-buffered x + out rows
        fixed = 2 * w_bytes + small_bytes
        budget_rows = max(sub, (budget - fixed) // per_row)
        tm = _choose_row_tile(M, sub, budget_rows)
    else:
        tn = 512 if D_out_pad % 512 == 0 else (256 if D_out_pad % 256 == 0 else 128)
        while True:
            fixed = 2 * D * tn * itemsize + small_bytes
            per_row = (2 * D + 2 * tn + (D if do_norm else 0)) * itemsize
            budget_rows = (budget - fixed) // per_row
            if budget_rows >= sub or tn <= 128:
                break
            tn //= 2                                # shrink columns before rows
        budget_rows = max(sub, budget_rows)
        tm = _choose_row_tile(M, sub, budget_rows)

    tm = _maybe_split_for_megacore(M, tm, sub)

    M_pad = _round_up(M, tm)
    if M_pad != M:
        x2 = jnp.pad(x2, ((0, M_pad - M), (0, 0)))

    out_shape = jax.ShapeDtypeStruct((M_pad, D_out_pad), dtype)

    if resident_w:
        kernel = functools.partial(_fused_resident_kernel, eps=eps, do_norm=do_norm)
        in_specs = [pl.BlockSpec((tm, D), lambda i: (i, 0))]
        args = [x2]
        if do_norm:
            in_specs += [pl.BlockSpec((1, D), lambda i: (0, 0)),
                         pl.BlockSpec((1, D), lambda i: (0, 0))]
            args += [g2, b2]
        in_specs += [pl.BlockSpec((D, tn), lambda i: (0, 0)),   # W resident
                     pl.BlockSpec((1, tn), lambda i: (0, 0))]   # bias resident
        args += [w, bias2]
        out = pl.pallas_call(
            kernel,
            out_shape=out_shape,
            grid_spec=pltpu.PrefetchScalarGridSpec(
                num_scalar_prefetch=0,
                grid=(M_pad // tm,),
                in_specs=in_specs,
                out_specs=pl.BlockSpec((tm, tn), lambda i: (i, 0)),
            ),
            compiler_params=pltpu.CompilerParams(
                dimension_semantics=("parallel",),
                vmem_limit_bytes=budget,
            ),
        )(*args)
    elif do_norm:
        out = pl.pallas_call(
            functools.partial(_fused_tiled_norm_kernel, eps=eps),
            out_shape=out_shape,
            grid_spec=pltpu.PrefetchScalarGridSpec(
                num_scalar_prefetch=0,
                grid=(M_pad // tm, D_out_pad // tn),
                in_specs=[
                    pl.BlockSpec((tm, D), lambda i, j: (i, 0)),   # resident over j
                    pl.BlockSpec((1, D), lambda i, j: (0, 0)),
                    pl.BlockSpec((1, D), lambda i, j: (0, 0)),
                    pl.BlockSpec((D, tn), lambda i, j: (0, j)),
                    pl.BlockSpec((1, tn), lambda i, j: (0, j)),
                ],
                out_specs=pl.BlockSpec((tm, tn), lambda i, j: (i, j)),
                scratch_shapes=[pltpu.VMEM((tm, D), dtype)],      # normalized tile
            ),
            compiler_params=pltpu.CompilerParams(
                # j carries the cached-LN scratch -> must stay "arbitrary".
                dimension_semantics=("parallel", "arbitrary"),
                vmem_limit_bytes=budget,
            ),
        )(x2, g2, b2, w, bias2)
    else:
        out = pl.pallas_call(
            _tiled_linear_kernel,
            out_shape=out_shape,
            grid_spec=pltpu.PrefetchScalarGridSpec(
                num_scalar_prefetch=0,
                grid=(M_pad // tm, D_out_pad // tn),
                in_specs=[
                    pl.BlockSpec((tm, D), lambda i, j: (i, 0)),
                    pl.BlockSpec((D, tn), lambda i, j: (0, j)),
                    pl.BlockSpec((1, tn), lambda i, j: (0, j)),
                ],
                out_specs=pl.BlockSpec((tm, tn), lambda i, j: (i, j)),
            ),
            compiler_params=pltpu.CompilerParams(
                dimension_semantics=("parallel", "parallel"),
                vmem_limit_bytes=budget,
            ),
        )(x2, w, bias2)

    if M_pad != M or D_out_pad != D_out:
        out = out[:M, :D_out]
    return out.reshape(*lead, D_out)


def prenorm_linear_pallas(x, gamma, beta, w, bias, eps=1e-5):
    return _fused_norm_matmul(x, w, bias, gamma=gamma, beta=beta, eps=eps)


def linear_pallas(x, w, b):
    return _fused_norm_matmul(x, w, b)


# ---------------------------------------------------------------------------
# Stand-alone tiled LayerNorm (generic-fn fallback path of PreNorm).
# ---------------------------------------------------------------------------
def layernorm_pallas(x, gamma, beta, eps=1e-5):
    orig_shape = x.shape
    D = orig_shape[-1]
    dtype = x.dtype
    itemsize = jnp.dtype(dtype).itemsize
    x2 = x.reshape(-1, D)
    M = x2.shape[0]

    budget = _vmem_budget_bytes()
    sub = _sublane(dtype)
    # Purely HBM-bound: grow tiles as far as the budget allows (2 in + 2 out bufs).
    budget_rows = max(sub, (budget - 4 * D * 4) // (4 * D * itemsize))
    tm = _choose_row_tile(M, sub, budget_rows, cap=2048)
    tm = _maybe_split_for_megacore(M, tm, sub)

    M_pad = _round_up(M, tm)
    if M_pad != M:
        x2 = jnp.pad(x2, ((0, M_pad - M), (0, 0)))

    out = pl.pallas_call(
        functools.partial(_layernorm_kernel, eps=eps),
        out_shape=jax.ShapeDtypeStruct((M_pad, D), dtype),
        grid_spec=pltpu.PrefetchScalarGridSpec(
            num_scalar_prefetch=0,
            grid=(M_pad // tm,),
            in_specs=[
                pl.BlockSpec((tm, D), lambda i: (i, 0)),
                pl.BlockSpec((1, D), lambda i: (0, 0)),
                pl.BlockSpec((1, D), lambda i: (0, 0)),
            ],
            out_specs=pl.BlockSpec((tm, D), lambda i: (i, 0)),
        ),
        compiler_params=pltpu.CompilerParams(
            dimension_semantics=("parallel",),
            vmem_limit_bytes=budget,
        ),
    )(x2, gamma.reshape(1, D), beta.reshape(1, D))

    if M_pad != M:
        out = out[:M]
    return out.reshape(orig_shape)


# ---------------------------------------------------------------------------
# Module wrappers.
# ---------------------------------------------------------------------------
class LinearPallas:
    """Linear(dim -> dim_out) used as the wrapped `fn` in the demo."""

    def __init__(self, w, b):
        self.w = w
        self.b = b

    def __call__(self, x):
        return linear_pallas(x, self.w, self.b)


class PreNormPallas:
    """PreNorm(dim, fn): y = fn(LayerNorm(x), **kwargs).

    When `fn` is a LinearPallas (the common case), LayerNorm and the matmul
    are fused into a single Pallas kernel.  Any other `fn` falls back to the
    tiled LayerNorm kernel followed by `fn`.
    """

    def __init__(self, dim, fn, dtype=jnp.float32, eps=1e-5):
        # nn.LayerNorm default init: weight=1, bias=0, eps=1e-5.
        self.gamma = jnp.ones((dim,), dtype)
        self.beta = jnp.zeros((dim,), dtype)
        self.eps = eps
        self.fn = fn

    def __call__(self, x, **kwargs):
        if isinstance(self.fn, LinearPallas) and not kwargs:
            return prenorm_linear_pallas(
                x, self.gamma, self.beta, self.fn.w, self.fn.b, self.eps)
        # TODO(synk): arbitrary `fn` cannot be fused generically; fall back to LN -> fn.
        return self.fn(layernorm_pallas(x, self.gamma, self.beta, self.eps), **kwargs)


if __name__ == "__main__":
    B, N, D = 2, 8, 32  # batch=2, seq=8, hidden(dim)=32

    key = jax.random.PRNGKey(0)
    kx, kw, kb = jax.random.split(key, 3)
    x = jax.random.normal(kx, (B, N, D), jnp.float32)

    # Deterministic weights for the wrapped `fn` (Linear dim -> dim).
    w = jax.random.normal(kw, (D, D), jnp.float32) * 0.02
    b = jax.random.normal(kb, (D,), jnp.float32) * 0.02

    prenorm = PreNormPallas(D, LinearPallas(w, b))
    out = prenorm(x)
    out = jax.block_until_ready(out)

    # Reference check in plain JAX (PyTorch LayerNorm semantics).
    mean = jnp.mean(x, axis=-1, keepdims=True)
    var = jnp.mean((x - mean) ** 2, axis=-1, keepdims=True)
    ref = (x - mean) / jnp.sqrt(var + 1e-5)
    ref = ref * prenorm.gamma + prenorm.beta
    ref = jnp.einsum("bnd,de->bne", ref, w) + b

    assert out.shape == (B, N, D)
    assert jnp.allclose(out, ref, atol=1e-4, rtol=1e-4)

    # Also exercise the generic (unfused) fallback path once.
    out2 = PreNormPallas(D, lambda t: linear_pallas(t, w, b))(x)
    out2 = jax.block_until_ready(out2)
    assert jnp.allclose(out2, ref, atol=1e-4, rtol=1e-4)

    print("KERNEL_OK")
</pallas_src>

<mosaic_0001>
module attributes {stable_mosaic.version = 11 : i64} {
  func.func @_fused_resident_kernel(%arg0: i32, %arg1: memref<8x32xf32, #tpu.memory_space<vmem>>, %arg2: memref<1x32xf32, #tpu.memory_space<vmem>>, %arg3: memref<1x32xf32, #tpu.memory_space<vmem>>, %arg4: memref<32x128xf32, #tpu.memory_space<vmem>>, %arg5: memref<1x128xf32, #tpu.memory_space<vmem>>, %arg6: memref<8x128xf32, #tpu.memory_space<vmem>>) attributes {dimension_semantics = [#tpu.dimension_semantics<parallel>], iteration_bounds = array<i64: 2>, scalar_prefetch = 0 : i64, scratch_operands = 0 : i64, tpu.core_type = #tpu.core_type<tc>, window_params = [{transform_indices = @transform_0, window_bounds = array<i64: 8, 32>}, {pipeline_mode = #tpu.pipeline_mode<synchronous>, transform_indices = @transform_1, window_bounds = array<i64: 1, 32>}, {pipeline_mode = #tpu.pipeline_mode<synchronous>, transform_indices = @transform_2, window_bounds = array<i64: 1, 32>}, {pipeline_mode = #tpu.pipeline_mode<synchronous>, transform_indices = @transform_3, window_bounds = array<i64: 32, 128>}, {pipeline_mode = #tpu.pipeline_mode<synchronous>, transform_indices = @transform_4, window_bounds = array<i64: 1, 128>}, {transform_indices = @transform_5, window_bounds = array<i64: 8, 128>}]} {
    %c0 = arith.constant 0 : index
    %c0_0 = arith.constant 0 : index
    %0 = vector.load %arg1[%c0, %c0_0] : memref<8x32xf32, #tpu.memory_space<vmem>>, vector<8x32xf32>
    %cst = arith.constant dense<0.000000e+00> : vector<8xf32>
    %1 = vector.multi_reduction <add>, %0, %cst [1] : vector<8x32xf32> to vector<8xf32>
    %2 = vector.shape_cast %1 : vector<8xf32> to vector<8x1xf32>
    %cst_1 = arith.constant 3.200000e+01 : f32
    %3 = vector.broadcast %cst_1 : f32 to vector<8x1xf32>
    %4 = arith.divf %2, %3 : vector<8x1xf32>
    %5 = vector.broadcast %4 : vector<8x1xf32> to vector<8x32xf32>
    %6 = arith.subf %0, %5 : vector<8x32xf32>
    %7 = arith.mulf %6, %6 : vector<8x32xf32>
    %cst_2 = arith.constant dense<0.000000e+00> : vector<8xf32>
    %8 = vector.multi_reduction <add>, %7, %cst_2 [1] : vector<8x32xf32> to vector<8xf32>
    %9 = vector.shape_cast %8 : vector<8xf32> to vector<8x1xf32>
    %cst_3 = arith.constant 3.200000e+01 : f32
    %10 = vector.broadcast %cst_3 : f32 to vector<8x1xf32>
    %11 = arith.divf %9, %10 : vector<8x1xf32>
    %cst_4 = arith.constant 9.99999974E-6 : f32
    %12 = vector.broadcast %cst_4 : f32 to vector<8x1xf32>
    %13 = arith.addf %11, %12 : vector<8x1xf32>
    %14 = math.rsqrt %13 : vector<8x1xf32>
    %15 = vector.broadcast %14 : vector<8x1xf32> to vector<8x32xf32>
    %16 = arith.mulf %6, %15 : vector<8x32xf32>
    %c0_5 = arith.constant 0 : index
    %c0_6 = arith.constant 0 : index
    %17 = vector.load %arg2[%c0_5, %c0_6] : memref<1x32xf32, #tpu.memory_space<vmem>>, vector<1x32xf32>
    %18 = vector.broadcast %17 : vector<1x32xf32> to vector<8x32xf32>
    %19 = arith.mulf %16, %18 : vector<8x32xf32>
    %c0_7 = arith.constant 0 : index
    %c0_8 = arith.constant 0 : index
    %20 = vector.load %arg3[%c0_7, %c0_8] : memref<1x32xf32, #tpu.memory_space<vmem>>, vector<1x32xf32>
    %21 = vector.broadcast %20 : vector<1x32xf32> to vector<8x32xf32>
    %22 = arith.addf %19, %21 : vector<8x32xf32>
    %c0_9 = arith.constant 0 : index
    %c0_10 = arith.constant 0 : index
    %23 = vector.load %arg4[%c0_9, %c0_10] : memref<32x128xf32, #tpu.memory_space<vmem>>, vector<32x128xf32>
    %cst_11 = arith.constant dense<0.000000e+00> : vector<8x128xf32>
    %24 = tpu.matmul %22, %23, %cst_11 {dimension_numbers = #tpu.dot_dimension_numbers<[1], [0], [0], [1], [0, 0, 1, 1], [], []>} : vector<8x32xf32>, vector<32x128xf32>, vector<8x128xf32> -> vector<8x128xf32>
    %c0_12 = arith.constant 0 : index
    %c0_13 = arith.constant 0 : index
    %25 = vector.load %arg5[%c0_12, %c0_13] : memref<1x128xf32, #tpu.memory_space<vmem>>, vector<1x128xf32>
    %26 = vector.broadcast %25 : vector<1x128xf32> to vector<8x128xf32>
    %27 = arith.addf %24, %26 : vector<8x128xf32>
    %c0_14 = arith.constant 0 : index
    %c0_15 = arith.constant 0 : index
    %28 = vector.load %arg6[%c0_14, %c0_15] : memref<8x128xf32, #tpu.memory_space<vmem>>, vector<8x128xf32>
    tpu.vector_store %arg6[%c0_14, %c0_15], %27 {strides = array<i32>} : memref<8x128xf32, #tpu.memory_space<vmem>>, vector<8x128xf32>,
    return
  }
  func.func @transform_0(%arg0: i32) -> (i32, i32) {
    %c0_i32 = arith.constant 0 : i32
    %c0_i32_0 = arith.constant 0 : i32
    return %arg0, %c0_i32 : i32, i32
  }
  func.func @transform_1(%arg0: i32) -> (i32, i32) {
    %c0_i32 = arith.constant 0 : i32
    %c0_i32_0 = arith.constant 0 : i32
    %c0_i32_1 = arith.constant 0 : i32
    return %c0_i32, %c0_i32_0 : i32, i32
  }
  func.func @transform_2(%arg0: i32) -> (i32, i32) {
    %c0_i32 = arith.constant 0 : i32
    %c0_i32_0 = arith.constant 0 : i32
    %c0_i32_1 = arith.constant 0 : i32
    return %c0_i32, %c0_i32_0 : i32, i32
  }
  func.func @transform_3(%arg0: i32) -> (i32, i32) {
    %c0_i32 = arith.constant 0 : i32
    %c0_i32_0 = arith.constant 0 : i32
    %c0_i32_1 = arith.constant 0 : i32
    return %c0_i32, %c0_i32_0 : i32, i32
  }
  func.func @transform_4(%arg0: i32) -> (i32, i32) {
    %c0_i32 = arith.constant 0 : i32
    %c0_i32_0 = arith.constant 0 : i32
    %c0_i32_1 = arith.constant 0 : i32
    return %c0_i32, %c0_i32_0 : i32, i32
  }
  func.func @transform_5(%arg0: i32) -> (i32, i32) {
    %c0_i32 = arith.constant 0 : i32
    %c0_i32_0 = arith.constant 0 : i32
    return %arg0, %c0_i32 : i32, i32
  }
}

</mosaic_0001>

<llo_original>
// kernel: tpu_custom_call.1
$region0: #{tpu_custom_call.1}
  #allocation0 [shape = 'u32[]', space=smem, size = 0x4, offset = 0x4, fixed_abs, tag = 'smem constant byte address 0x4 - core index']
  #allocation1 [shape = 'u32[144,128]{1,0:T(1,128)}', space=vmem, size = 0x12000, scoped, tag = 'internal scratch']
  %s0 = inlined_call_operand.hbm [shape: f32[16,32], index: 0, kind: input, shape index: {}]
  %s1 = inlined_call_operand.vmem [shape: f32[1,32], index: 1, kind: input, shape index: {}]
  %s2 = inlined_call_operand.vmem [shape: f32[1,32], index: 2, kind: input, shape index: {}]
  %s3 = inlined_call_operand.hbm [shape: f32[32,128], index: 3, kind: input, shape index: {}]
  %s4 = inlined_call_operand.vmem [shape: f32[1,128], index: 4, kind: input, shape index: {}]
  %s5 = inlined_call_operand.hbm [shape: f32[16,128], index: 5, kind: output, shape index: {}]
  %s6 = sld [smem:[#allocation0]]
  $region61: #{tpu_custom_call.1} parent=0
    _
  %s8 = ssub.s32 1, %s6
  %s9 = scalar_select 0, %s8, %s6
  $region1: #{tpu_custom_call.1} parent=0
    #allocation2 [shape = 'u8[8192]{0}', space=vmem, size = 0x2000, scoped, tag = 'input window, operand 0']
    #allocation3 [shape = 's32[2]{0}', space=sflag, size = 0x8, scoped, tag = 'scoped memory for tpu_custom_call.1']
    #allocation4 [shape = 's32[2]{0}', space=sflag, size = 0x8, scoped, tag = 'scoped memory for tpu_custom_call.1']
    #allocation5 [shape = 'u8[16384]{0}', space=vmem, size = 0x4000, scoped, tag = 'input window, operand 3, single buffered']
    #allocation6 [shape = 's32[1]{0}', space=sflag, size = 0x4, scoped, tag = 'scoped memory for tpu_custom_call.1']
    #allocation7 [shape = 'u8[8192]{0}', space=vmem, size = 0x2000, scoped, tag = 'output window, operand 0']
    %10 = vsyncpa [#allocation3], 0
    %s11 = scalar_lea.sflag [#allocation3], 1
    %12 = vsyncpa %s11, 0
    %13 = vsyncpa [#allocation6], 0
    %14 = vsyncpa [#allocation4], 0
    %s15 = scalar_lea.sflag [#allocation4], 1
    %16 = vsyncpa %s15, 0
    loop: start=0, step=1, limit=4
    $region2: #{tpu_custom_call.1} parent=1 // loop_pre_header
      _
    $region3: #{tpu_custom_call.1} parent=1 // loop_header
      %s18 = sphi 0, %s22
      %p19 = scmp.ge.s32.totalorder %s18, 4
      %s28 = sphi 0, %s30
      %s31 = sphi 0, %s28
      %s32 = sphi 0, %s31
      %s48 = sphi 0, %s32
      %s52 = sphi 0, %s52
      %s54 = sphi 0, %s52
      %s55 = sphi 0, %s54
      %s69 = sphi 0, %s55
      %s73 = sphi 0, %s73
      %s75 = sphi 0, %s73
      %s76 = sphi 0, %s75
      %s90 = sphi 0, %s76
      %s94 = sphi 0, %s94
      %s96 = sphi 0, %s94
      %s97 = sphi 0, %s96
      %s111 = sphi 0, %s97
      %s115 = sphi 0, %s115
      %s117 = sphi 0, %s115
      %s118 = sphi 0, %s117
      %s132 = sphi 0, %s118
      %s138 = sphi 0, %s140
      %s141 = sphi 0, %s138
      %s142 = sphi 0, %s141
      %s158 = sphi 0, %s142
    $region4: #{tpu_custom_call.1} parent=1 // loop_header_branch
      %21 = sbr.rel (%p19) target = $region8
    $region5: #{tpu_custom_call.1} parent=1 // loop_body
      %s23 = ssub.s32 %s18, 1
      %s24 = ssub.s32 %s18, 2
      %s25 = sadd.s32 %s18, 1
      %s26 = ssub.s32 %s18, %s25
      %p27 = scmp.eq.s32.totalorder %s26, 0
      %s29 = sadd.s32 %s28, 1
      %s30 = scalar_select %p27, %s28, %s29
      %p33 = pneg %p27
      %p34 = scmp.eq.s32.totalorder %s18, 1
      %p35 = por %p33, %p34
      %p36 = scmp.ne.s32.totalorder %s28, %s31
      %p37 = scmp.eq.s32.totalorder %s18, 0
      %p38 = por %p36, %p37
      %p39 = scmp.ne.s32.totalorder %s28, %s31
      %p40 = scmp.eq.s32.totalorder %s23, 1
      %p41 = por %p39, %p40
      %p42 = scmp.ne.s32.totalorder %s31, %s32
      %p43 = scmp.eq.s32.totalorder %s23, 0
      %p44 = por %p42, %p43
      %p45 = scmp.ne.s32.totalorder %s31, %s32
      %p46 = scmp.eq.s32.totalorder %s24, 1
      %p47 = por %p45, %p46
      %p49 = scmp.ne.s32.totalorder %s32, %s48
      %p50 = scmp.eq.s32.totalorder %s24, 0
      %p51 = por %p49, %p50
      %s53 = sadd.s32 %s52, 1
      %p56 = scmp.eq.s32.totalorder %s18, 1
      %p57 = scmp.ne.s32.totalorder %s52, %s54
      %p58 = scmp.eq.s32.totalorder %s18, 0
      %p59 = por %p57, %p58
      %p60 = scmp.ne.s32.totalorder %s52, %s54
      %p61 = scmp.eq.s32.totalorder %s23, 1
      %p62 = por %p60, %p61
      %p63 = scmp.ne.s32.totalorder %s54, %s55
      %p64 = scmp.eq.s32.totalorder %s23, 0
      %p65 = por %p63, %p64
      %p66 = scmp.ne.s32.totalorder %s54, %s55
      %p67 = scmp.eq.s32.totalorder %s24, 1
      %p68 = por %p66, %p67
      %p70 = scmp.ne.s32.totalorder %s55, %s69
      %p71 = scmp.eq.s32.totalorder %s24, 0
      %p72 = por %p70, %p71
      %s74 = sadd.s32 %s73, 1
      %p77 = scmp.eq.s32.totalorder %s18, 1
      %p78 = scmp.ne.s32.totalorder %s73, %s75
      %p79 = scmp.eq.s32.totalorder %s18, 0
      %p80 = por %p78, %p79
      %p81 = scmp.ne.s32.totalorder %s73, %s75
      %p82 = scmp.eq.s32.totalorder %s23, 1
      %p83 = por %p81, %p82
      %p84 = scmp.ne.s32.totalorder %s75, %s76
      %p85 = scmp.eq.s32.totalorder %s23, 0
      %p86 = por %p84, %p85
      %p87 = scmp.ne.s32.totalorder %s75, %s76
      %p88 = scmp.eq.s32.totalorder %s24, 1
      %p89 = por %p87, %p88
      %p91 = scmp.ne.s32.totalorder %s76, %s90
      %p92 = scmp.eq.s32.totalorder %s24, 0
      %p93 = por %p91, %p92
      %s95 = sadd.s32 %s94, 1
      %p98 = scmp.eq.s32.totalorder %s18, 1
      %p99 = scmp.ne.s32.totalorder %s94, %s96
      %p100 = scmp.eq.s32.totalorder %s18, 0
      %p101 = por %p99, %p100
      %p102 = scmp.ne.s32.totalorder %s94, %s96
      %p103 = scmp.eq.s32.totalorder %s23, 1
      %p104 = por %p102, %p103
      %p105 = scmp.ne.s32.totalorder %s96, %s97
      %p106 = scmp.eq.s32.totalorder %s23, 0
      %p107 = por %p105, %p106
      %p108 = scmp.ne.s32.totalorder %s96, %s97
      %p109 = scmp.eq.s32.totalorder %s24, 1
      %p110 = por %p108, %p109
      %p112 = scmp.ne.s32.totalorder %s97, %s111
      %p113 = scmp.eq.s32.totalorder %s24, 0
      %p114 = por %p112, %p113
      %s116 = sadd.s32 %s115, 1
      %p119 = scmp.eq.s32.totalorder %s18, 1
      %p120 = scmp.ne.s32.totalorder %s115, %s117
      %p121 = scmp.eq.s32.totalorder %s18, 0
      %p122 = por %p120, %p121
      %p123 = scmp.ne.s32.totalorder %s115, %s117
      %p124 = scmp.eq.s32.totalorder %s23, 1
      %p125 = por %p123, %p124
      %p126 = scmp.ne.s32.totalorder %s117, %s118
      %p127 = scmp.eq.s32.totalorder %s23, 0
      %p128 = por %p126, %p127
      %p129 = scmp.ne.s32.totalorder %s117, %s118
      %p130 = scmp.eq.s32.totalorder %s24, 1
      %p131 = por %p129, %p130
      %p133 = scmp.ne.s32.totalorder %s118, %s132
      %p134 = scmp.eq.s32.totalorder %s24, 0
      %p135 = por %p133, %p134
      %s136 = ssub.s32 %s18, %s25
      %p137 = scmp.eq.s32.totalorder %s136, 0
      %s139 = sadd.s32 %s138, 1
      %s140 = scalar_select %p137, %s138, %s139
      %p143 = pneg %p137
      %p144 = scmp.eq.s32.totalorder %s18, 1
      %p145 = por %p143, %p144
      %p146 = scmp.ne.s32.totalorder %s138, %s141
      %p147 = scmp.eq.s32.totalorder %s18, 0
      %p148 = por %p146, %p147
      %p149 = scmp.ne.s32.totalorder %s138, %s141
      %p150 = scmp.eq.s32.totalorder %s23, 1
      %p151 = por %p149, %p150
      %p152 = scmp.ne.s32.totalorder %s141, %s142
      %p153 = scmp.eq.s32.totalorder %s23, 0
      %p154 = por %p152, %p153
      %p155 = scmp.ne.s32.totalorder %s141, %s142
      %p156 = scmp.eq.s32.totalorder %s24, 1
      %p157 = por %p155, %p156
      %p159 = scmp.ne.s32.totalorder %s142, %s158
      %p160 = scmp.eq.s32.totalorder %s24, 0
      %p161 = por %p159, %p160
      %p162 = scmp.le.s32.totalorder 1, %s18
      %p163 = scmp.lt.s32.totalorder %s18, 3
      %p164 = pnand %p162, %p163
      %p165 = pneg %p164
      // Predicated region
      $region9: #{tpu_custom_call.1} parent=5 // pred_check
        _
      $region10: #{tpu_custom_call.1} parent=5 // pred_check_branch
        %167 = sbr.rel (%p164) target = $region12
      $region11: #{tpu_custom_call.1} parent=5 // pred_region
        %s168 = ssub.s32 %s18, 1
        // Predicated region
        $region13: #{tpu_custom_call.1} parent=11 // pred_check
          %p169 = pneg %p65
        $region14: #{tpu_custom_call.1} parent=11 // pred_check_branch
          %171 = sbr.rel (%p169) target = $region16
        $region15: #{tpu_custom_call.1} parent=11 // pred_region
          _
        $region16: #{tpu_custom_call.1} parent=11 // pred_fallthru
          _
        // Predicated region
        $region17: #{tpu_custom_call.1} parent=11 // pred_check
          %p172 = pneg %p86
        $region18: #{tpu_custom_call.1} parent=11 // pred_check_branch
          %174 = sbr.rel (%p172) target = $region20
        $region19: #{tpu_custom_call.1} parent=11 // pred_region
          _
        $region20: #{tpu_custom_call.1} parent=11 // pred_fallthru
          _
        // Predicated region
        $region21: #{tpu_custom_call.1} parent=11 // pred_check
          %p175 = pneg %p107
        $region22: #{tpu_custom_call.1} parent=11 // pred_check_branch
          %177 = sbr.rel (%p175) target = $region24
        $region23: #{tpu_custom_call.1} parent=11 // pred_region
          %s179 = ssub.s32 512, 512
          %180 = vsyncadd [#allocation6], %s179
          %s181 = sshll.u32 [#allocation5], 4
          %s182 = int_to_ptr.vmem [resolvable:$true] %s181
          %187 = dma.hbm_to_vmem [thread:$0]  %s3, 512, %s182, [#allocation6], 128, 128, 8
        $region24: #{tpu_custom_call.1} parent=11 // pred_fallthru
          _
        // Predicated region
        $region25: #{tpu_custom_call.1} parent=11 // pred_check
          %p188 = pneg %p128
        $region26: #{tpu_custom_call.1} parent=11 // pred_check_branch
          %190 = sbr.rel (%p188) target = $region28
        $region27: #{tpu_custom_call.1} parent=11 // pred_region
          _
        $region28: #{tpu_custom_call.1} parent=11 // pred_fallthru
          _
      $region12: #{tpu_custom_call.1} parent=5 // pred_fallthru
        _
      %p191 = scmp.lt.s32.totalorder %s18, 2
      // Predicated region
      $region29: #{tpu_custom_call.1} parent=5 // pred_check
        %p192 = pneg %p191
      $region30: #{tpu_custom_call.1} parent=5 // pred_check_branch
        %194 = sbr.rel (%p192) target = $region32
      $region31: #{tpu_custom_call.1} parent=5 // pred_region
        // Predicated region
        $region33: #{tpu_custom_call.1} parent=31 // pred_check
          %p195 = pneg %p38
        $region34: #{tpu_custom_call.1} parent=31 // pred_check_branch
          %197 = sbr.rel (%p195) target = $region36
        $region35: #{tpu_custom_call.1} parent=31 // pred_region
          %s198 = sand.u32 %s28, 1
          %s199 = scalar_lea.sflag [#allocation3], %s198
          %s200 = sand.u32 %s28, 1
          %s201 = smul.addr %s200, 8
          %s202 = scalar_lea.vmem [#allocation2], %s201
          %s204 = ssub.s32 128, 128
          %205 = vsyncadd %s199, %s204
          %s206 = smul.addr %s18, 128
          %s207 = scalar_lea.hbm %s0, %s206
          %s209 = sshll.u32 %s202, 4
          %s210 = int_to_ptr.vmem [resolvable:$true] %s209
          %212 = dma.hbm_to_vmem [thread:$0]  %s207, 128, %s210, %s199
        $region36: #{tpu_custom_call.1} parent=31 // pred_fallthru
          _
      $region32: #{tpu_custom_call.1} parent=5 // pred_fallthru
        _
      %p213 = scmp.le.s32.totalorder 1, %s18
      %p214 = scmp.lt.s32.totalorder %s18, 3
      %p215 = pnand %p213, %p214
      %p216 = pneg %p215
      // Predicated region
      $region37: #{tpu_custom_call.1} parent=5 // pred_check
        _
      $region38: #{tpu_custom_call.1} parent=5 // pred_check_branch
        %218 = sbr.rel (%p215) target = $region40
      $region39: #{tpu_custom_call.1} parent=5 // pred_region
        %s219 = ssub.s32 %s18, 1
        %s220 = sand.u32 %s31, 1
        %s221 = scalar_lea.sflag [#allocation3], %s220
        %s222 = sand.u32 %s31, 1
        %s223 = smul.addr %s222, 8
        %s224 = scalar_lea.vmem [#allocation2], %s223
        // Predicated region
        $region41: #{tpu_custom_call.1} parent=39 // pred_check
          %p225 = pneg %p44
        $region42: #{tpu_custom_call.1} parent=39 // pred_check_branch
          %227 = sbr.rel (%p225) target = $region44
        $region43: #{tpu_custom_call.1} parent=39 // pred_region
          %228 = dma.done %s221, 128
        $region44: #{tpu_custom_call.1} parent=39 // pred_fallthru
          _
        // Predicated region
        $region45: #{tpu_custom_call.1} parent=39 // pred_check
          %p229 = pneg %p107
        $region46: #{tpu_custom_call.1} parent=39 // pred_check_branch
          %231 = sbr.rel (%p229) target = $region48
        $region47: #{tpu_custom_call.1} parent=39 // pred_region
          %232 = dma.done [#allocation6], 512
        $region48: #{tpu_custom_call.1} parent=39 // pred_fallthru
          _
        %s233 = sand.u32 %s31, 1
        %s234 = scalar_lea.sflag [#allocation3], %s233
        %s235 = sand.u32 %s31, 1
        %s236 = smul.addr %s235, 8
        %s237 = scalar_lea.vmem [#allocation2], %s236
        %p238 = pneg %p44
        %p239 = pneg %p41
        %p240 = pneg %p65
        %p241 = pneg %p62
        %p242 = pneg %p86
        %p243 = pneg %p83
        %p244 = pneg %p107
        %p245 = pneg %p104
        %p246 = pneg %p128
        %p247 = pneg %p125
        %p248 = pneg %p154
        %p249 = pneg %p151
        %s250 = sand.u32 %s141, 1
        %s251 = scalar_lea.sflag [#allocation4], %s250
        %s252 = sand.u32 %s141, 1
        %s253 = smul.addr %s252, 8
        %s254 = scalar_lea.vmem [#allocation7], %s253
        %v255 = vld [vmem:[%s224] sm:$0xff]
        %vm256 = vcmask 261120
        %v257 = vsel %vm256, %v255, 0.0
        %258 = vadd.xlane.f32.xlu0 %v257
        %v259 = vpop.xlane.xlu0 %258
        %v260 = vrcp.pop 32.0
        %v261 = vmul.f32 %v259, %v260
        %v262 = vsub.f32 %v255, %v261
        %v263 = vmul.f32 %v262, %v262
        %v264 = vsel %vm256, %v263, 0.0
        %265 = vadd.xlane.f32.xlu0 %v264
        %v266 = vpop.xlane.xlu0 %265
        %v267 = vmul.f32 %v266, %v260
        %v268 = vadd.f32 %v267, 1e-05
        %v269 = vrsqrt.pop %v268
        %v270 = vmul.f32 %v262, %v269
        %v271 = vld [vmem:[%s1] sm:$0x1]
        %v273 = vlaneseq
        %v274 = vshrl.u32 %v273, 7
        %v275 = vsub.s32 0, %v274
        %v276 = vrot.slane %v271, %v275
        %v278 = vmul.f32 %v270, %v276
        %v279 = vld [vmem:[%s2] sm:$0x1]
        %v281 = vlaneseq
        %v282 = vshrl.u32 %v281, 7
        %v283 = vsub.s32 0, %v282
        %v284 = vrot.slane %v279, %v283
        %v286 = vadd.f32 %v278, %v284
        %v287 = vld [vmem:[#allocation5] sm:$0xff]
        %v288 = vld [vmem:[#allocation5 + $0x8] sm:$0xff]
        %v289 = vld [vmem:[#allocation5 + $0x10] sm:$0xff]
        %v290 = vld [vmem:[#allocation5 + $0x18] sm:$0xff]
        %v291 = vld [vmem:[%s4] sm:$0x1]
        %v293 = vlaneseq
        %v294 = vshrl.u32 %v293, 7
        %v295 = vsub.s32 0, %v294
        %v296 = vrot.slane %v291, %v295
        %v299 = vsel %vm256, %v286, 0
        %301 = vmatprep.subr.mxu0 0.0
        %302 = vmatpush1.msra.mxu0 %v287
        %303 = vmatprep.subr.mxu0 0.0
        %304 = vmatpush1.msra.mxu0 %v288
        %305 = vmatprep.subr.mxu0 0.0
        %306 = vmatpush1.msra.mxu0 %v289
        %307 = vmatprep.subr.mxu0 0.0
        %308 = vmatpush1.msra.mxu0 %v290
        %309 = vmatprep.subr.mxu0 0.0
        %310 = vmatpush1.msra.mxu0 0.0
        %311 = vmatprep.subr.mxu0 0.0
        %312 = vmatpush1.msra.mxu0 0.0
        %313 = vmatprep.subr.mxu0 0.0
        %314 = vmatpush1.msra.mxu0 0.0
        %315 = vmatprep.subr.mxu0 0.0
        %316 = vmatpush1.msra.mxu0 0.0
        %317 = vmatprep.subr.mxu0 0.0
        %318 = vmatpush1.msra.mxu0 0.0
        %319 = vmatprep.subr.mxu0 0.0
        %320 = vmatpush1.msra.mxu0 0.0
        %321 = vmatprep.subr.mxu0 0.0
        %322 = vmatpush1.msra.mxu0 0.0
        %323 = vmatprep.subr.mxu0 0.0
        %324 = vmatpush1.msra.mxu0 0.0
        %325 = vmatprep.subr.mxu0 0.0
        %326 = vmatpush1.msra.mxu0 0.0
        %327 = vmatprep.subr.mxu0 0.0
        %328 = vmatpush1.msra.mxu0 0.0
        %329 = vmatprep.subr.mxu0 0.0
        %330 = vmatpush1.msra.mxu0 0.0
        %331 = vmatprep.subr.mxu0 0.0
        %332 = vmatpush1.msra.mxu0 0.0
        %333 = vmatprep.subr.mxu0 0.0
        %334 = vmatpush1.msra.mxu0 0.0
        %335 = vmatprep.subr.mxu0 0.0
        %336 = vmatpush1.msra.mxu0 0.0
        %337 = vmatprep.subr.mxu0 0.0
        %338 = vmatpush1.msra.mxu0 0.0
        %339 = vmatprep.subr.mxu0 0.0
        %340 = vmatpush1.msra.mxu0 0.0
        %341 = vmatprep.subr.mxu0 0.0
        %342 = vmatpush1.msra.mxu0 0.0
        %343 = vmatprep.subr.mxu0 0.0
        %344 = vmatpush1.msra.mxu0 0.0
        %345 = vmatprep.subr.mxu0 0.0
        %346 = vmatpush1.msra.mxu0 0.0
        %347 = vmatprep.subr.mxu0 0.0
        %348 = vmatpush1.msra.mxu0 0.0
        %349 = vmatprep.subr.mxu0 0.0
        %350 = vmatpush1.msra.mxu0 0.0
        %351 = vmatprep.subr.mxu0 0.0
        %352 = vmatpush1.msra.mxu0 0.0
        %353 = vmatprep.subr.mxu0 0.0
        %354 = vmatpush1.msra.mxu0 0.0
        %355 = vmatprep.subr.mxu0 0.0
        %356 = vmatpush1.msra.mxu0 0.0
        %357 = vmatprep.subr.mxu0 0.0
        %358 = vmatpush1.msra.mxu0 0.0
        %359 = vmatprep.subr.mxu0 0.0
        %360 = vmatpush1.msra.mxu0 0.0
        %361 = vmatprep.subr.mxu0 0.0
        %362 = vmatpush1.msra.mxu0 0.0
        %363 = vmatprep.subr.mxu0 0.0
        %364 = vmatpush1.msra.mxu0 0.0
        %365 = vmatprep.mubr.f32.mxu0 0.0
        %366 = vmatmul.mubr.f32.gmra.mrb[0].mxu0 %v299
        %v367 = vpop.f32.mrb[0].mxu0
        %v368 = vadd.f32 %v296, %v367
        %v369 = vpop.f32.mrb[0].mxu0
        %370 = vdwg.mxu0
        %371 = vst [vmem:[%s254] sm:$0xff] %v368
        %s372 = sand.u32 %s141, 1
        %s373 = scalar_lea.sflag [#allocation4], %s372
        %s374 = sand.u32 %s141, 1
        %s375 = smul.addr %s374, 8
        %s376 = scalar_lea.vmem [#allocation7], %s375
        // Predicated region
        $region49: #{tpu_custom_call.1} parent=39 // pred_check
          %p377 = pneg %p151
        $region50: #{tpu_custom_call.1} parent=39 // pred_check_branch
          %379 = sbr.rel (%p377) target = $region52
        $region51: #{tpu_custom_call.1} parent=39 // pred_region
          %s381 = ssub.s32 128, 128
          %382 = vsyncadd %s373, %s381
          %s383 = smul.addr %s23, 128
          %s384 = scalar_lea.hbm %s5, %s383
          %s386 = sshll.u32 %s376, 4
          %s387 = int_to_ptr.vmem [resolvable:$true] %s386
          %389 = dma.vmem_to_hbm [thread:$0]  %s387, 128, %s384, %s373
        $region52: #{tpu_custom_call.1} parent=39 // pred_fallthru
          _
      $region40: #{tpu_custom_call.1} parent=5 // pred_fallthru
        _
      %p390 = scmp.le.s32.totalorder 2, %s18
      // Predicated region
      $region53: #{tpu_custom_call.1} parent=5 // pred_check
        %p391 = pneg %p390
      $region54: #{tpu_custom_call.1} parent=5 // pred_check_branch
        %393 = sbr.rel (%p391) target = $region56
      $region55: #{tpu_custom_call.1} parent=5 // pred_region
        %s394 = ssub.s32 %s18, 2
        // Predicated region
        $region57: #{tpu_custom_call.1} parent=55 // pred_check
          %p395 = pneg %p157
        $region58: #{tpu_custom_call.1} parent=55 // pred_check_branch
          %397 = sbr.rel (%p395) target = $region60
        $region59: #{tpu_custom_call.1} parent=55 // pred_region
          %s398 = sand.u32 %s142, 1
          %s399 = scalar_lea.sflag [#allocation4], %s398
          %s400 = sand.u32 %s142, 1
          %s401 = smul.addr %s400, 8
          %s402 = scalar_lea.vmem [#allocation7], %s401
          %403 = dma.done %s399, 128
        $region60: #{tpu_custom_call.1} parent=55 // pred_fallthru
          _
      $region56: #{tpu_custom_call.1} parent=5 // pred_fallthru
        _
    $region6: #{tpu_custom_call.1} parent=1 // loop_footer
      %s22 = sadd.s32 1, %s18
    $region7: #{tpu_custom_call.1} parent=1 // loop_footer_branch
      %17 = sbr.rel target = $region3
    $region8: #{tpu_custom_call.1} parent=1 // loop_exit
      _
    %404 = vsyncpa [#allocation3], 1
    %s405 = scalar_lea.sflag [#allocation3], 1
    %406 = vsyncpa %s405, 1
    %407 = vsyncpa [#allocation6], 1
    %408 = vsyncpa [#allocation4], 1
    %s409 = scalar_lea.sflag [#allocation4], 1
    %410 = vsyncpa %s409, 1

</llo_original>
